<compile_context>
chip_gen: v5e
topology: v5e:2x2
jax: 0.10.0
libtpu: 0.0.40
codegen_flags: <defaults>
</compile_context>

<pallas_src>
import functools

import jax
import jax.numpy as jnp
from jax import lax
from jax.experimental import pallas as pl
from jax.experimental.pallas import tpu as pltpu


def _round_up(x, m):
    return (x + m - 1) // m * m


def _ppo_kernel(n_actions, x_ref, w1_ref, b1_ref, w2_ref, b2_ref,
                wh_ref, bh_ref, out_ref):
    # fc1 + relu (f32 accumulation, activation cast to weight dtype for MXU)
    x = x_ref[...]
    h1 = jnp.dot(x, w1_ref[...], preferred_element_type=jnp.float32) + b1_ref[...]
    h1 = jnp.maximum(h1, 0.0).astype(w2_ref.dtype)

    # fc2 + relu
    h2 = jnp.dot(h1, w2_ref[...], preferred_element_type=jnp.float32) + b2_ref[...]
    h2 = jnp.maximum(h2, 0.0).astype(wh_ref.dtype)

    # fused head: one matmul produces [policy logits | value | zero padding]
    logits = jnp.dot(h2, wh_ref[...], preferred_element_type=jnp.float32) + bh_ref[...]

    hp = logits.shape[-1]
    # (1, head_p) masks; broadcasting in the wheres avoids [tb, 128] temporaries
    col = lax.broadcasted_iota(jnp.int32, (1, hp), 1)
    is_policy = col < n_actions
    is_value = col == n_actions

    # masked softmax over the policy columns only
    neg_inf = jnp.float32(-jnp.inf)
    m = jnp.max(jnp.where(is_policy, logits, neg_inf), axis=-1, keepdims=True)
    e = jnp.where(is_policy, jnp.exp(logits - m), 0.0)
    denom = jnp.sum(e, axis=-1, keepdims=True)
    inv = pl.reciprocal(denom, approx=True)
    inv = inv * (2.0 - denom * inv)          # one Newton step -> ~f32 accuracy
    policy = e * inv

    # single unmasked lane-dense store: softmax cols, raw value col, zeros pad
    out_ref[...] = jnp.where(is_value, logits, policy).astype(out_ref.dtype)


def ppo_actor_critic_forward(state, params, *, block_b=1024,
                             out_dtype=jnp.float32):
    """state: [B, input_dims] (any float dtype).  params: dict from init_params.

    Returns (policy [B, n_actions] softmax, value [B, 1]) in `out_dtype`."""
    w1, b1 = params["w1"], params["b1"]
    w2, b2 = params["w2"], params["b2"]
    wh, bh = params["w_head"], params["b_head"]
    n_actions = params["n_actions"]

    B, in_dims = state.shape
    assert in_dims == params["input_dims"], "state feature dim mismatch"
    head_p = wh.shape[1]

    # sublane packing: bf16 packs 16 rows per vreg, f32 packs 8
    sub = 16 if w1.dtype == jnp.bfloat16 else 8
    b_min = _round_up(max(B, 1), sub)

    # tile choice: big tiles amortize the ~0.35us/step overhead; batches large
    # enough to split get >= 2 grid steps so v7x uses both TensorCores.
    if b_min > 256:
        tb = min(block_b, _round_up(pl.cdiv(b_min, 2), sub))
    else:
        tb = min(block_b, b_min)
    b_pad = _round_up(b_min, tb)

    # cheap row-only padding + cast (no lane inflation, no full-size zero slab)
    x = state.astype(w1.dtype)
    if b_pad != B:
        x = jnp.pad(x, ((0, b_pad - B), (0, 0)))

    kernel = functools.partial(_ppo_kernel, n_actions)

    out = pl.pallas_call(
        kernel,
        out_shape=jax.ShapeDtypeStruct((b_pad, head_p), out_dtype),
        grid=(b_pad // tb,),
        in_specs=[
            # activations: tiled over batch; last dim == full array dim (legal)
            pl.BlockSpec((tb, in_dims), lambda i: (i, 0)),
            # weights/biases: constant index_map -> stay VMEM-resident
            pl.BlockSpec(w1.shape, lambda i: (0, 0)),
            pl.BlockSpec(b1.shape, lambda i: (0, 0)),
            pl.BlockSpec(w2.shape, lambda i: (0, 0)),
            pl.BlockSpec(b2.shape, lambda i: (0, 0)),
            pl.BlockSpec(wh.shape, lambda i: (0, 0)),
            pl.BlockSpec(bh.shape, lambda i: (0, 0)),
        ],
        out_specs=pl.BlockSpec((tb, head_p), lambda i: (i, 0)),
        compiler_params=pltpu.CompilerParams(
            dimension_semantics=("parallel",),          # shard B tiles over TCs
            vmem_limit_bytes=32 * 1024 * 1024),          # covers v5e at big tiles
    )(x, w1, b1, w2, b2, wh, bh)

    policy = out[:B, :n_actions]
    value = out[:B, n_actions:n_actions + 1]
    return policy, value


def init_params(key, input_dims, fc1_dims, fc2_dims, n_actions,
                dtype=jnp.float32):
    """nn.Linear-style U(-1/sqrt(fan_in), 1/sqrt(fan_in)) init, then:
       * weights stored as [in, out] (kernel computes x @ W),
       * hidden/head output dims zero-padded to multiples of 128 (lane-dense);
         the INPUT dim is NOT padded (x stays [B, input_dims]),
       * policy + value heads fused into one weight/bias,
       * weights optionally cast to bf16 (fine on v5e/v6e/v7x: MXU takes bf16
         with f32 accumulation); biases stay f32."""
    fc1_p = _round_up(fc1_dims, 128)
    fc2_p = _round_up(fc2_dims, 128)
    head_p = _round_up(n_actions + 1, 128)

    def raw_linear(k, fan_in, fan_out):
        kw, kb = jax.random.split(k)
        bound = 1.0 / float(fan_in) ** 0.5
        w = jax.random.uniform(kw, (fan_in, fan_out), jnp.float32, -bound, bound)
        b = jax.random.uniform(kb, (1, fan_out), jnp.float32, -bound, bound)
        return w, b

    k1, k2, k3, k4 = jax.random.split(key, 4)
    w1r, b1r = raw_linear(k1, input_dims, fc1_dims)
    w2r, b2r = raw_linear(k2, fc1_dims, fc2_dims)
    wpr, bpr = raw_linear(k3, fc2_dims, n_actions)
    wvr, bvr = raw_linear(k4, fc2_dims, 1)

    def pad_w(w, pi, po):
        return jnp.zeros((pi, po), jnp.float32).at[:w.shape[0], :w.shape[1]].set(w)

    def pad_b(b, po):
        return jnp.zeros((1, po), jnp.float32).at[:, :b.shape[1]].set(b)

    w1 = pad_w(w1r, input_dims, fc1_p)        # input dim NOT lane-padded
    b1 = pad_b(b1r, fc1_p)
    w2 = pad_w(w2r, fc1_p, fc2_p)
    b2 = pad_b(b2r, fc2_p)

    # fused head: [policy | value | zero padding]
    w_head = jnp.zeros((fc2_p, head_p), jnp.float32)
    w_head = w_head.at[:fc2_dims, :n_actions].set(wpr)
    w_head = w_head.at[:fc2_dims, n_actions].set(wvr[:, 0])
    b_head = jnp.zeros((1, head_p), jnp.float32)
    b_head = b_head.at[:, :n_actions].set(bpr)
    b_head = b_head.at[:, n_actions].set(bvr[0, 0])

    return {
        "w1": w1.astype(dtype), "b1": b1,
        "w2": w2.astype(dtype), "b2": b2,
        "w_head": w_head.astype(dtype), "b_head": b_head,
        "n_actions": n_actions, "input_dims": input_dims,
    }


def _reference_forward(state, params):
    """Pure-JAX f32 reference on the (padded) params."""
    n_a = params["n_actions"]
    w1 = params["w1"].astype(jnp.float32)
    w2 = params["w2"].astype(jnp.float32)
    wh = params["w_head"].astype(jnp.float32)
    b1, b2, bh = params["b1"], params["b2"], params["b_head"]

    h1 = jnp.maximum(state.astype(jnp.float32) @ w1 + b1, 0.0)
    h2 = jnp.maximum(h1 @ w2 + b2, 0.0)
    logits = h2 @ wh + bh
    policy = jax.nn.softmax(logits[:, :n_a], axis=-1)
    value = logits[:, n_a:n_a + 1]
    return policy, value


if __name__ == "__main__":
    # Small shapes consistent with the module: PPO on a flat observation vector.
    B, INPUT_DIMS, FC1, FC2, N_ACTIONS = 8, 32, 64, 64, 8

    key = jax.random.PRNGKey(0)
    k_params, k_state, k_big = jax.random.split(key, 3)
    state = jax.random.normal(k_state, (B, INPUT_DIMS), jnp.float32)

    # --- f32 weights: exact-semantics check against the reference -----------
    params_f32 = init_params(k_params, INPUT_DIMS, FC1, FC2, N_ACTIONS,
                             dtype=jnp.float32)
    policy, value = ppo_actor_critic_forward(state, params_f32)
    jax.block_until_ready((policy, value))

    ref_policy, ref_value = _reference_forward(state, params_f32)
    assert policy.shape == (B, N_ACTIONS) and value.shape == (B, 1)
    assert jnp.allclose(policy, ref_policy, atol=1e-5, rtol=1e-5)
    assert jnp.allclose(value, ref_value, atol=1e-5, rtol=1e-5)
    assert jnp.allclose(jnp.sum(policy, axis=-1), 1.0, atol=1e-5)

    # --- larger batch: exercises row padding + multi-step parallel grid -----
    BIG = 600
    state_big = jax.random.normal(k_big, (BIG, INPUT_DIMS), jnp.float32)
    policy_big, value_big = ppo_actor_critic_forward(state_big, params_f32)
    jax.block_until_ready((policy_big, value_big))
    ref_pb_big, ref_vb_big = _reference_forward(state_big, params_f32)
    assert policy_big.shape == (BIG, N_ACTIONS) and value_big.shape == (BIG, 1)
    assert jnp.allclose(policy_big, ref_pb_big, atol=1e-5, rtol=1e-5)
    assert jnp.allclose(value_big, ref_vb_big, atol=1e-5, rtol=1e-5)

    # --- bf16 weights/activations (all generations), f32 accumulation -------
    params_bf16 = init_params(k_params, INPUT_DIMS, FC1, FC2, N_ACTIONS,
                              dtype=jnp.bfloat16)
    policy_b, value_b = ppo_actor_critic_forward(state, params_bf16)
    jax.block_until_ready((policy_b, value_b))

    ref_pb, ref_vb = _reference_forward(state, params_bf16)
    assert jnp.allclose(policy_b, ref_pb, atol=2e-2)
    assert jnp.allclose(value_b, ref_vb, atol=2e-2)
    assert jnp.allclose(jnp.sum(policy_b, axis=-1), 1.0, atol=1e-3)

    # --- optional bf16 output slab (halves store traffic) -------------------
    policy_o, value_o = ppo_actor_critic_forward(state, params_bf16,
                                                 out_dtype=jnp.bfloat16)
    jax.block_until_ready((policy_o, value_o))
    assert jnp.allclose(policy_o.astype(jnp.float32), ref_pb, atol=3e-2)
    assert jnp.allclose(value_o.astype(jnp.float32), ref_vb, atol=3e-2)
    assert jnp.allclose(jnp.sum(policy_o.astype(jnp.float32), axis=-1), 1.0,
                        atol=1e-2)

    print("KERNEL_OK")
</pallas_src>

<mosaic_0001>
module attributes {stable_mosaic.version = 11 : i64} {
  func.func @_ppo_kernel(%arg0: i32, %arg1: memref<8x32xf32, #tpu.memory_space<vmem>>, %arg2: memref<32x128xf32, #tpu.memory_space<vmem>>, %arg3: memref<1x128xf32, #tpu.memory_space<vmem>>, %arg4: memref<128x128xf32, #tpu.memory_space<vmem>>, %arg5: memref<1x128xf32, #tpu.memory_space<vmem>>, %arg6: memref<128x128xf32, #tpu.memory_space<vmem>>, %arg7: memref<1x128xf32, #tpu.memory_space<vmem>>, %arg8: memref<8x128xf32, #tpu.memory_space<vmem>>) attributes {dimension_semantics = [#tpu.dimension_semantics<parallel>], iteration_bounds = array<i64: 1>, scalar_prefetch = 0 : i64, scratch_operands = 0 : i64, tpu.core_type = #tpu.core_type<tc>, window_params = [{transform_indices = @transform_0, window_bounds = array<i64: 8, 32>}, {pipeline_mode = #tpu.pipeline_mode<synchronous>, transform_indices = @transform_1, window_bounds = array<i64: 32, 128>}, {pipeline_mode = #tpu.pipeline_mode<synchronous>, transform_indices = @transform_2, window_bounds = array<i64: 1, 128>}, {pipeline_mode = #tpu.pipeline_mode<synchronous>, transform_indices = @transform_3, window_bounds = array<i64: 128, 128>}, {pipeline_mode = #tpu.pipeline_mode<synchronous>, transform_indices = @transform_4, window_bounds = array<i64: 1, 128>}, {pipeline_mode = #tpu.pipeline_mode<synchronous>, transform_indices = @transform_5, window_bounds = array<i64: 128, 128>}, {pipeline_mode = #tpu.pipeline_mode<synchronous>, transform_indices = @transform_6, window_bounds = array<i64: 1, 128>}, {transform_indices = @transform_7, window_bounds = array<i64: 8, 128>}]} {
    %c0 = arith.constant 0 : index
    %c0_0 = arith.constant 0 : index
    %0 = vector.load %arg1[%c0, %c0_0] : memref<8x32xf32, #tpu.memory_space<vmem>>, vector<8x32xf32>
    %c0_1 = arith.constant 0 : index
    %c0_2 = arith.constant 0 : index
    %1 = vector.load %arg2[%c0_1, %c0_2] : memref<32x128xf32, #tpu.memory_space<vmem>>, vector<32x128xf32>
    %cst = arith.constant dense<0.000000e+00> : vector<8x128xf32>
    %2 = tpu.matmul %0, %1, %cst {dimension_numbers = #tpu.dot_dimension_numbers<[1], [0], [0], [1], [0, 0, 1, 1], [], []>} : vector<8x32xf32>, vector<32x128xf32>, vector<8x128xf32> -> vector<8x128xf32>
    %c0_3 = arith.constant 0 : index
    %c0_4 = arith.constant 0 : index
    %3 = vector.load %arg3[%c0_3, %c0_4] : memref<1x128xf32, #tpu.memory_space<vmem>>, vector<1x128xf32>
    %4 = vector.broadcast %3 : vector<1x128xf32> to vector<8x128xf32>
    %5 = arith.addf %2, %4 : vector<8x128xf32>
    %cst_5 = arith.constant 0.000000e+00 : f32
    %6 = vector.broadcast %cst_5 : f32 to vector<8x128xf32>
    %7 = arith.maximumf %5, %6 : vector<8x128xf32>
    %c0_6 = arith.constant 0 : index
    %c0_7 = arith.constant 0 : index
    %8 = vector.load %arg4[%c0_6, %c0_7] : memref<128x128xf32, #tpu.memory_space<vmem>>, vector<128x128xf32>
    %cst_8 = arith.constant dense<0.000000e+00> : vector<8x128xf32>
    %9 = tpu.matmul %7, %8, %cst_8 {dimension_numbers = #tpu.dot_dimension_numbers<[1], [0], [0], [1], [0, 0, 1, 1], [], []>} : vector<8x128xf32>, vector<128x128xf32>, vector<8x128xf32> -> vector<8x128xf32>
    %c0_9 = arith.constant 0 : index
    %c0_10 = arith.constant 0 : index
    %10 = vector.load %arg5[%c0_9, %c0_10] : memref<1x128xf32, #tpu.memory_space<vmem>>, vector<1x128xf32>
    %11 = vector.broadcast %10 : vector<1x128xf32> to vector<8x128xf32>
    %12 = arith.addf %9, %11 : vector<8x128xf32>
    %cst_11 = arith.constant 0.000000e+00 : f32
    %13 = vector.broadcast %cst_11 : f32 to vector<8x128xf32>
    %14 = arith.maximumf %12, %13 : vector<8x128xf32>
    %c0_12 = arith.constant 0 : index
    %c0_13 = arith.constant 0 : index
    %15 = vector.load %arg6[%c0_12, %c0_13] : memref<128x128xf32, #tpu.memory_space<vmem>>, vector<128x128xf32>
    %cst_14 = arith.constant dense<0.000000e+00> : vector<8x128xf32>
    %16 = tpu.matmul %14, %15, %cst_14 {dimension_numbers = #tpu.dot_dimension_numbers<[1], [0], [0], [1], [0, 0, 1, 1], [], []>} : vector<8x128xf32>, vector<128x128xf32>, vector<8x128xf32> -> vector<8x128xf32>
    %c0_15 = arith.constant 0 : index
    %c0_16 = arith.constant 0 : index
    %17 = vector.load %arg7[%c0_15, %c0_16] : memref<1x128xf32, #tpu.memory_space<vmem>>, vector<1x128xf32>
    %18 = vector.broadcast %17 : vector<1x128xf32> to vector<8x128xf32>
    %19 = arith.addf %16, %18 : vector<8x128xf32>
    %20 = tpu.iota {dimensions = array<i32: 1>} : vector<1x128xi32>
    %c8_i32 = arith.constant 8 : i32
    %21 = vector.broadcast %c8_i32 : i32 to vector<1x128xi32>
    %22 = arith.cmpi slt, %20, %21 : vector<1x128xi32>
    %c8_i32_17 = arith.constant 8 : i32
    %23 = vector.broadcast %c8_i32_17 : i32 to vector<1x128xi32>
    %24 = arith.cmpi eq, %20, %23 : vector<1x128xi32>
    %cst_18 = arith.constant 0xFF800000 : f32
    %25 = vector.shape_cast %22 : vector<1x128xi1> to vector<1x128xi1>
    %26 = vector.broadcast %25 : vector<1x128xi1> to vector<8x128xi1>
    %27 = vector.broadcast %cst_18 : f32 to vector<8x128xf32>
    %28 = arith.select %26, %19, %27 : vector<8x128xi1>, vector<8x128xf32>
    %cst_19 = arith.constant dense<0xFF800000> : vector<8xf32>
    %29 = vector.multi_reduction <maximumf>, %28, %cst_19 [1] : vector<8x128xf32> to vector<8xf32>
    %30 = vector.shape_cast %29 : vector<8xf32> to vector<8x1xf32>
    %31 = vector.broadcast %30 : vector<8x1xf32> to vector<8x128xf32>
    %32 = arith.subf %19, %31 : vector<8x128xf32>
    %33 = math.exp %32 : vector<8x128xf32>
    %cst_20 = arith.constant 0.000000e+00 : f32
    %34 = vector.shape_cast %22 : vector<1x128xi1> to vector<1x128xi1>
    %35 = vector.broadcast %34 : vector<1x128xi1> to vector<8x128xi1>
    %36 = vector.broadcast %cst_20 : f32 to vector<8x128xf32>
    %37 = arith.select %35, %33, %36 : vector<8x128xi1>, vector<8x128xf32>
    %cst_21 = arith.constant dense<0.000000e+00> : vector<8xf32>
    %38 = vector.multi_reduction <add>, %37, %cst_21 [1] : vector<8x128xf32> to vector<8xf32>
    %39 = vector.shape_cast %38 : vector<8xf32> to vector<8x1xf32>
    %40 = tpu.reciprocal %39 {approx = true} : vector<8x1xf32> -> vector<8x1xf32>
    %41 = arith.mulf %39, %40 : vector<8x1xf32>
    %cst_22 = arith.constant 2.000000e+00 : f32
    %42 = vector.broadcast %cst_22 : f32 to vector<8x1xf32>
    %43 = arith.subf %42, %41 : vector<8x1xf32>
    %44 = arith.mulf %40, %43 : vector<8x1xf32>
    %45 = vector.broadcast %44 : vector<8x1xf32> to vector<8x128xf32>
    %46 = arith.mulf %37, %45 : vector<8x128xf32>
    %47 = vector.shape_cast %24 : vector<1x128xi1> to vector<1x128xi1>
    %48 = vector.broadcast %47 : vector<1x128xi1> to vector<8x128xi1>
    %49 = arith.select %48, %19, %46 : vector<8x128xi1>, vector<8x128xf32>
    %c0_23 = arith.constant 0 : index
    %c0_24 = arith.constant 0 : index
    %50 = vector.load %arg8[%c0_23, %c0_24] : memref<8x128xf32, #tpu.memory_space<vmem>>, vector<8x128xf32>
    tpu.vector_store %arg8[%c0_23, %c0_24], %49 {strides = array<i32>} : memref<8x128xf32, #tpu.memory_space<vmem>>, vector<8x128xf32>,
    return
  }
  func.func @transform_0(%arg0: i32) -> (i32, i32) {
    %c0_i32 = arith.constant 0 : i32
    %c0_i32_0 = arith.constant 0 : i32
    return %arg0, %c0_i32 : i32, i32
  }
  func.func @transform_1(%arg0: i32) -> (i32, i32) {
    %c0_i32 = arith.constant 0 : i32
    %c0_i32_0 = arith.constant 0 : i32
    %c0_i32_1 = arith.constant 0 : i32
    return %c0_i32, %c0_i32_0 : i32, i32
  }
  func.func @transform_2(%arg0: i32) -> (i32, i32) {
    %c0_i32 = arith.constant 0 : i32
    %c0_i32_0 = arith.constant 0 : i32
    %c0_i32_1 = arith.constant 0 : i32
    return %c0_i32, %c0_i32_0 : i32, i32
  }
  func.func @transform_3(%arg0: i32) -> (i32, i32) {
    %c0_i32 = arith.constant 0 : i32
    %c0_i32_0 = arith.constant 0 : i32
    %c0_i32_1 = arith.constant 0 : i32
    return %c0_i32, %c0_i32_0 : i32, i32
  }
  func.func @transform_4(%arg0: i32) -> (i32, i32) {
    %c0_i32 = arith.constant 0 : i32
    %c0_i32_0 = arith.constant 0 : i32
    %c0_i32_1 = arith.constant 0 : i32
    return %c0_i32, %c0_i32_0 : i32, i32
  }
  func.func @transform_5(%arg0: i32) -> (i32, i32) {
    %c0_i32 = arith.constant 0 : i32
    %c0_i32_0 = arith.constant 0 : i32
    %c0_i32_1 = arith.constant 0 : i32
    return %c0_i32, %c0_i32_0 : i32, i32
  }
  func.func @transform_6(%arg0: i32) -> (i32, i32) {
    %c0_i32 = arith.constant 0 : i32
    %c0_i32_0 = arith.constant 0 : i32
    %c0_i32_1 = arith.constant 0 : i32
    return %c0_i32, %c0_i32_0 : i32, i32
  }
  func.func @transform_7(%arg0: i32) -> (i32, i32) {
    %c0_i32 = arith.constant 0 : i32
    %c0_i32_0 = arith.constant 0 : i32
    return %arg0, %c0_i32 : i32, i32
  }
}

</mosaic_0001>

<llo_original>
// kernel: tpu_custom_call.1
$region0: #{tpu_custom_call.1}
  #allocation0 [shape = 'u32[]', space=smem, size = 0x4, offset = 0x4, fixed_abs, tag = 'smem constant byte address 0x4 - core index']
  #allocation1 [shape = 'u32[72,128]{1,0:T(1,128)}', space=vmem, size = 0x9000, scoped, tag = 'internal scratch']
  %s0 = inlined_call_operand.hbm [shape: f32[8,32], index: 0, kind: input, shape index: {}]
  %s1 = inlined_call_operand.hbm [shape: f32[32,128], index: 1, kind: input, shape index: {}]
  %s2 = inlined_call_operand.vmem [shape: f32[1,128], index: 2, kind: input, shape index: {}]
  %s3 = inlined_call_operand.hbm [shape: f32[128,128], index: 3, kind: input, shape index: {}]
  %s4 = inlined_call_operand.vmem [shape: f32[1,128], index: 4, kind: input, shape index: {}]
  %s5 = inlined_call_operand.hbm [shape: f32[128,128], index: 5, kind: input, shape index: {}]
  %s6 = inlined_call_operand.vmem [shape: f32[1,128], index: 6, kind: input, shape index: {}]
  %s7 = inlined_call_operand.hbm [shape: f32[8,128], index: 7, kind: output, shape index: {}]
  %s8 = sld [smem:[#allocation0]]
  $region54: #{tpu_custom_call.1} parent=0
    _
  %s10 = ssub.s32 1, %s8
  %s11 = scalar_select 0, %s10, %s8
  $region1: #{tpu_custom_call.1} parent=0
    #allocation2 [shape = 'u8[4096]{0}', space=vmem, size = 0x1000, scoped, tag = 'input window, operand 0, single buffered']
    #allocation3 [shape = 's32[1]{0}', space=sflag, size = 0x4, scoped, tag = 'scoped memory for tpu_custom_call.1']
    #allocation4 [shape = 's32[1]{0}', space=sflag, size = 0x4, scoped, tag = 'scoped memory for tpu_custom_call.1']
    #allocation5 [shape = 'u8[16384]{0}', space=vmem, size = 0x4000, scoped, tag = 'input window, operand 1, single buffered']
    #allocation6 [shape = 's32[1]{0}', space=sflag, size = 0x4, scoped, tag = 'scoped memory for tpu_custom_call.1']
    #allocation7 [shape = 'u8[65536]{0}', space=vmem, size = 0x10000, scoped, tag = 'input window, operand 3, single buffered']
    #allocation8 [shape = 'u8[65536]{0}', space=vmem, size = 0x10000, scoped, tag = 'input window, operand 5, single buffered']
    #allocation9 [shape = 's32[1]{0}', space=sflag, size = 0x4, scoped, tag = 'scoped memory for tpu_custom_call.1']
    #allocation10 [shape = 'u8[4096]{0}', space=vmem, size = 0x1000, scoped, tag = 'output window, operand 0, single buffered']
    %12 = vsyncpa [#allocation3], 0
    %13 = vsyncpa [#allocation6], 0
    %14 = vsyncpa [#allocation9], 0
    %15 = vsyncpa [#allocation4], 0
    // Predicated region
    $region2: #{tpu_custom_call.1} parent=1 // pred_check
      _
    $region3: #{tpu_custom_call.1} parent=1 // pred_check_branch
      %17 = sbr.rel (0) target = $region5
    $region4: #{tpu_custom_call.1} parent=1 // pred_region
      %19 = vsyncadd [#allocation3], 0
      %s21 = sshll.u32 %s0, 4
      %s22 = int_to_ptr.hbm [resolvable:$true] %s21
      %s23 = sshll.u32 [#allocation2], 4
      %s24 = int_to_ptr.vmem [resolvable:$true] %s23
      %26 = dma.hbm_to_vmem [thread:$0]  %s22, 128, %s24, [#allocation3]
    $region5: #{tpu_custom_call.1} parent=1 // pred_fallthru
      _
    // Predicated region
    $region6: #{tpu_custom_call.1} parent=1 // pred_check
      _
    $region7: #{tpu_custom_call.1} parent=1 // pred_check_branch
      %28 = sbr.rel (0) target = $region9
    $region8: #{tpu_custom_call.1} parent=1 // pred_region
      %30 = vsyncadd [#allocation6], 0
      %s31 = sshll.u32 %s1, 4
      %s32 = int_to_ptr.hbm [resolvable:$true] %s31
      %s33 = sshll.u32 [#allocation5], 4
      %s34 = int_to_ptr.vmem [resolvable:$true] %s33
      %39 = dma.hbm_to_vmem [thread:$0]  %s32, 512, %s34, [#allocation6], 128, 128, 8
    $region9: #{tpu_custom_call.1} parent=1 // pred_fallthru
      _
    // Predicated region
    $region10: #{tpu_custom_call.1} parent=1 // pred_check
      _
    $region11: #{tpu_custom_call.1} parent=1 // pred_check_branch
      %41 = sbr.rel (0) target = $region13
    $region12: #{tpu_custom_call.1} parent=1 // pred_region
      _
    $region13: #{tpu_custom_call.1} parent=1 // pred_fallthru
      _
    // Predicated region
    $region14: #{tpu_custom_call.1} parent=1 // pred_check
      _
    $region15: #{tpu_custom_call.1} parent=1 // pred_check_branch
      %43 = sbr.rel (0) target = $region17
    $region16: #{tpu_custom_call.1} parent=1 // pred_region
      %45 = vsyncadd [#allocation6], 0
      %s46 = sshll.u32 %s3, 4
      %s47 = int_to_ptr.hbm [resolvable:$true] %s46
      %s48 = sshll.u32 [#allocation7], 4
      %s49 = int_to_ptr.vmem [resolvable:$true] %s48
      %54 = dma.hbm_to_vmem [thread:$0]  %s47, 2048, %s49, [#allocation6], 128, 128, 8
    $region17: #{tpu_custom_call.1} parent=1 // pred_fallthru
      _
    // Predicated region
    $region18: #{tpu_custom_call.1} parent=1 // pred_check
      _
    $region19: #{tpu_custom_call.1} parent=1 // pred_check_branch
      %56 = sbr.rel (0) target = $region21
    $region20: #{tpu_custom_call.1} parent=1 // pred_region
      _
    $region21: #{tpu_custom_call.1} parent=1 // pred_fallthru
      _
    // Predicated region
    $region22: #{tpu_custom_call.1} parent=1 // pred_check
      _
    $region23: #{tpu_custom_call.1} parent=1 // pred_check_branch
      %58 = sbr.rel (0) target = $region25
    $region24: #{tpu_custom_call.1} parent=1 // pred_region
      %60 = vsyncadd [#allocation9], 0
      %s61 = sshll.u32 %s5, 4
      %s62 = int_to_ptr.hbm [resolvable:$true] %s61
      %s63 = sshll.u32 [#allocation8], 4
      %s64 = int_to_ptr.vmem [resolvable:$true] %s63
      %69 = dma.hbm_to_vmem [thread:$0]  %s62, 2048, %s64, [#allocation9], 128, 128, 8
    $region25: #{tpu_custom_call.1} parent=1 // pred_fallthru
      _
    // Predicated region
    $region26: #{tpu_custom_call.1} parent=1 // pred_check
      _
    $region27: #{tpu_custom_call.1} parent=1 // pred_check_branch
      %71 = sbr.rel (0) target = $region29
    $region28: #{tpu_custom_call.1} parent=1 // pred_region
      _
    $region29: #{tpu_custom_call.1} parent=1 // pred_fallthru
      _
    // Predicated region
    $region30: #{tpu_custom_call.1} parent=1 // pred_check
      _
    $region31: #{tpu_custom_call.1} parent=1 // pred_check_branch
      %73 = sbr.rel (0) target = $region33
    $region32: #{tpu_custom_call.1} parent=1 // pred_region
      %75 = dma.done [#allocation3], 128
    $region33: #{tpu_custom_call.1} parent=1 // pred_fallthru
      _
    // Predicated region
    $region34: #{tpu_custom_call.1} parent=1 // pred_check
      _
    $region35: #{tpu_custom_call.1} parent=1 // pred_check_branch
      %77 = sbr.rel (0) target = $region37
    $region36: #{tpu_custom_call.1} parent=1 // pred_region
      %79 = dma.done [#allocation6], 512
    $region37: #{tpu_custom_call.1} parent=1 // pred_fallthru
      _
    // Predicated region
    $region38: #{tpu_custom_call.1} parent=1 // pred_check
      _
    $region39: #{tpu_custom_call.1} parent=1 // pred_check_branch
      %81 = sbr.rel (0) target = $region41
    $region40: #{tpu_custom_call.1} parent=1 // pred_region
      %83 = dma.done [#allocation6], 2048
    $region41: #{tpu_custom_call.1} parent=1 // pred_fallthru
      _
    // Predicated region
    $region42: #{tpu_custom_call.1} parent=1 // pred_check
      _
    $region43: #{tpu_custom_call.1} parent=1 // pred_check_branch
      %85 = sbr.rel (0) target = $region45
    $region44: #{tpu_custom_call.1} parent=1 // pred_region
      %87 = dma.done [#allocation9], 2048
    $region45: #{tpu_custom_call.1} parent=1 // pred_fallthru
      _
    %v88 = vld [vmem:[#allocation2] sm:$0xff]
    %v89 = vld [vmem:[#allocation5] sm:$0xff]
    %v90 = vld [vmem:[#allocation5 + $0x8] sm:$0xff]
    %v91 = vld [vmem:[#allocation5 + $0x10] sm:$0xff]
    %v92 = vld [vmem:[#allocation5 + $0x18] sm:$0xff]
    %v93 = vld [vmem:[%s2] sm:$0x1]
    %v95 = vperm.slane %v93, 0
    %vm97 = vcmask 261120
    %v99 = vsel %vm97, %v88, 0
    %101 = vmatpush.msra.mxu0 0.0
    %102 = vmatpush.msra.mxu0 0.0
    %103 = vmatpush.msra.mxu0 0.0
    %104 = vmatpush.msra.mxu0 0.0
    %105 = vmatpush.msra.mxu0 0.0
    %106 = vmatpush.msra.mxu0 0.0
    %107 = vmatpush.msra.mxu0 0.0
    %108 = vmatpush.msra.mxu0 0.0
    %109 = vmatpush.msra.mxu0 0.0
    %110 = vmatpush.msra.mxu0 0.0
    %111 = vmatpush.msra.mxu0 0.0
    %112 = vmatpush.msra.mxu0 0.0
    %113 = vmatpush.msra.mxu0 %v92
    %114 = vmatpush.msra.mxu0 %v91
    %115 = vmatpush.msra.mxu0 %v90
    %116 = vmatpush.msra.mxu0 %v89
    %117 = vmatmul.f32.gmra.mxu0 %v99
    %v118 = vpop.f32.mrf.mxu0
    %v119 = vadd.f32 %v95, %v118
    %120 = vdwg.mxu0
    %v121 = vmax.f32 %v119, 0.0
    %v122 = vld [vmem:[#allocation7] sm:$0xff]
    %v123 = vld [vmem:[#allocation7 + $0x8] sm:$0xff]
    %v124 = vld [vmem:[#allocation7 + $0x10] sm:$0xff]
    %v125 = vld [vmem:[#allocation7 + $0x18] sm:$0xff]
    %v126 = vld [vmem:[#allocation7 + $0x20] sm:$0xff]
    %v127 = vld [vmem:[#allocation7 + $0x28] sm:$0xff]
    %v128 = vld [vmem:[#allocation7 + $0x30] sm:$0xff]
    %v129 = vld [vmem:[#allocation7 + $0x38] sm:$0xff]
    %v130 = vld [vmem:[#allocation7 + $0x40] sm:$0xff]
    %v131 = vld [vmem:[#allocation7 + $0x48] sm:$0xff]
    %v132 = vld [vmem:[#allocation7 + $0x50] sm:$0xff]
    %v133 = vld [vmem:[#allocation7 + $0x58] sm:$0xff]
    %v134 = vld [vmem:[#allocation7 + $0x60] sm:$0xff]
    %v135 = vld [vmem:[#allocation7 + $0x68] sm:$0xff]
    %v136 = vld [vmem:[#allocation7 + $0x70] sm:$0xff]
    %v137 = vld [vmem:[#allocation7 + $0x78] sm:$0xff]
    %v138 = vld [vmem:[%s4] sm:$0x1]
    %v140 = vperm.slane %v138, 0
    %142 = vmatpush.msra.mxu0 %v137
    %143 = vmatpush.msra.mxu0 %v136
    %144 = vmatpush.msra.mxu0 %v135
    %145 = vmatpush.msra.mxu0 %v134
    %146 = vmatpush.msra.mxu0 %v133
    %147 = vmatpush.msra.mxu0 %v132
    %148 = vmatpush.msra.mxu0 %v131
    %149 = vmatpush.msra.mxu0 %v130
    %150 = vmatpush.msra.mxu0 %v129
    %151 = vmatpush.msra.mxu0 %v128
    %152 = vmatpush.msra.mxu0 %v127
    %153 = vmatpush.msra.mxu0 %v126
    %154 = vmatpush.msra.mxu0 %v125
    %155 = vmatpush.msra.mxu0 %v124
    %156 = vmatpush.msra.mxu0 %v123
    %157 = vmatpush.msra.mxu0 %v122
    %158 = vmatmul.f32.gmra.mxu0 %v121
    %v159 = vpop.f32.mrf.mxu0
    %v160 = vadd.f32 %v140, %v159
    %161 = vdwg.mxu0
    %v162 = vmax.f32 %v160, 0.0
    %v163 = vld [vmem:[#allocation8] sm:$0xff]
    %v164 = vld [vmem:[#allocation8 + $0x8] sm:$0xff]
    %v165 = vld [vmem:[#allocation8 + $0x10] sm:$0xff]
    %v166 = vld [vmem:[#allocation8 + $0x18] sm:$0xff]
    %v167 = vld [vmem:[#allocation8 + $0x20] sm:$0xff]
    %v168 = vld [vmem:[#allocation8 + $0x28] sm:$0xff]
    %v169 = vld [vmem:[#allocation8 + $0x30] sm:$0xff]
    %v170 = vld [vmem:[#allocation8 + $0x38] sm:$0xff]
    %v171 = vld [vmem:[#allocation8 + $0x40] sm:$0xff]
    %v172 = vld [vmem:[#allocation8 + $0x48] sm:$0xff]
    %v173 = vld [vmem:[#allocation8 + $0x50] sm:$0xff]
    %v174 = vld [vmem:[#allocation8 + $0x58] sm:$0xff]
    %v175 = vld [vmem:[#allocation8 + $0x60] sm:$0xff]
    %v176 = vld [vmem:[#allocation8 + $0x68] sm:$0xff]
    %v177 = vld [vmem:[#allocation8 + $0x70] sm:$0xff]
    %v178 = vld [vmem:[#allocation8 + $0x78] sm:$0xff]
    %v179 = vld [vmem:[%s6] sm:$0x1]
    %v181 = vperm.slane %v179, 0
    %183 = vmatpush.msra.mxu0 %v178
    %184 = vmatpush.msra.mxu0 %v177
    %185 = vmatpush.msra.mxu0 %v176
    %186 = vmatpush.msra.mxu0 %v175
    %187 = vmatpush.msra.mxu0 %v174
    %188 = vmatpush.msra.mxu0 %v173
    %189 = vmatpush.msra.mxu0 %v172
    %190 = vmatpush.msra.mxu0 %v171
    %191 = vmatpush.msra.mxu0 %v170
    %192 = vmatpush.msra.mxu0 %v169
    %193 = vmatpush.msra.mxu0 %v168
    %194 = vmatpush.msra.mxu0 %v167
    %195 = vmatpush.msra.mxu0 %v166
    %196 = vmatpush.msra.mxu0 %v165
    %197 = vmatpush.msra.mxu0 %v164
    %198 = vmatpush.msra.mxu0 %v163
    %199 = vmatmul.f32.gmra.mxu0 %v162
    %v200 = vpop.f32.mrf.mxu0
    %v201 = vadd.f32 %v181, %v200
    %202 = vdwg.mxu0
    %v203 = vlaneseq
    %v204 = vand.u32 %v203, 127
    %vm205 = vcmp.lt.s32.totalorder %v204, 8
    %vm206 = vcmp.eq.s32.totalorder %v204, 8
    %v207 = vsel %vm205, 1, 0
    %vm208 = vcmp.eq.s32.totalorder %v207, 1
    %v209 = vsel %vm208, %v201, -inf
    %210 = vmax.xlane.f32.xlu0 %v209
    %v211 = vpop.xlane.xlu0 %210
    %v212 = vsub.f32 %v201, %v211
    %v213 = vmul.f32 %v212, 1.442695
    %v214 = vpow.pop %v213
    %v215 = vsel %vm208, %v214, 0.0
    %216 = vadd.xlane.f32.xlu0 %v215
    %v217 = vpop.xlane.xlu0 %216
    %v218 = vrcp.pop %v217
    %v219 = vmul.f32 %v217, %v218
    %v220 = vsub.f32 2.0, %v219
    %v221 = vmul.f32 %v218, %v220
    %v222 = vmul.f32 %v215, %v221
    %v223 = vsel %vm206, 1, 0
    %vm224 = vcmp.eq.s32.totalorder %v223, 1
    %v225 = vsel %vm224, %v201, %v222
    %226 = vst [vmem:[#allocation10] sm:$0xff] %v225
    // Predicated region
    $region46: #{tpu_custom_call.1} parent=1 // pred_check
      _
    $region47: #{tpu_custom_call.1} parent=1 // pred_check_branch
      %228 = sbr.rel (0) target = $region49
    $region48: #{tpu_custom_call.1} parent=1 // pred_region
      %230 = vsyncadd [#allocation4], 0
      %s232 = sshll.u32 [#allocation10], 4
      %s233 = int_to_ptr.vmem [resolvable:$true] %s232
      %s234 = sshll.u32 %s7, 4
      %s235 = int_to_ptr.hbm [resolvable:$true] %s234
      %237 = dma.vmem_to_hbm [thread:$0]  %s233, 128, %s235, [#allocation4]
    $region49: #{tpu_custom_call.1} parent=1 // pred_fallthru
      _
    // Predicated region
    $region50: #{tpu_custom_call.1} parent=1 // pred_check
      _
    $region51: #{tpu_custom_call.1} parent=1 // pred_check_branch
      %239 = sbr.rel (0) target = $region53
    $region52: #{tpu_custom_call.1} parent=1 // pred_region
      %241 = dma.done [#allocation4], 128
    $region53: #{tpu_custom_call.1} parent=1 // pred_fallthru
      _
    %242 = vsyncpa [#allocation3], 1
    %243 = vsyncpa [#allocation6], 1
    %244 = vsyncpa [#allocation9], 1
    %245 = vsyncpa [#allocation4], 1

</llo_original>
